<compile_context>
chip_gen: v7x
topology: tpu7x:2x2x1
jax: 0.10.0
libtpu: 0.0.40
codegen_flags: <defaults>
</compile_context>

<pallas_src>
import functools

import jax
import jax.numpy as jnp
from jax.experimental import pallas as pl
from jax.experimental.pallas import tpu as pltpu

LANES = 128
SUBLANES = 8
VREG_ELEMS = SUBLANES * LANES          # 1024 f32 elements per vreg
BLOCK_ROWS = 2048                      # (2048, 128) f32 block = 1 MiB per grid step
NUM_CORES = 2                          # v7x has 2 TCs; extra core-slice is free on v5e/v6e


def _metric_partial_sums_kernel(x_ref, out_ref, acc_ref, *,
                                blocks_per_core, block_rows, valid_rows):
    """Per-core partial sum over row-blocks of a lane-dense [R, 128] slab.

    Grid = (core, block); the `block` axis is the reduction.  Accumulation is
    into a vreg-shaped (8, 128) f32 scratch (pure VPU adds per step); the single
    cross-lane/sublane reduction runs only once per core in the final step.
    """
    c = pl.program_id(0)
    b = pl.program_id(1)

    @pl.when(b == 0)
    def _init():
        acc_ref[...] = jnp.zeros_like(acc_ref)

    # Logical block id for this core-slice.  The input index_map clamps the
    # physical block index into range, so here we only need a row-validity mask:
    # it zeroes both the overhang of a partial last block and any fully
    # out-of-range (clamped) block handed to the second core.
    blk = c * blocks_per_core + b
    row_ids = blk * block_rows + jax.lax.broadcasted_iota(
        jnp.int32, (block_rows, LANES), 0)

    x = x_ref[...].astype(jnp.float32)          # in-kernel cast (vreg-level)
    x = jnp.where(row_ids < valid_rows, x, 0.0)

    # (block_rows, 128) -> (block_rows/8, 8, 128); sum over the leading axis is
    # elementwise vreg adds (VPU only), fully hidden under the streaming DMA.
    acc_ref[...] += x.reshape(-1, SUBLANES, LANES).sum(axis=0)

    @pl.when(b == pl.num_programs(1) - 1)
    def _finalize():
        out_ref[...] = jnp.sum(acc_ref[...]).reshape(1, 1, 1)


def _pallas_sum_2d(x2d: jax.Array) -> jax.Array:
    """Sum of a lane-dense [R, 128] slab (R a multiple of 8), any real dtype."""
    R = x2d.shape[0]
    block_rows = BLOCK_ROWS if R >= BLOCK_ROWS else R      # R is a multiple of 8
    total_blocks = pl.cdiv(R, block_rows)
    blocks_per_core = pl.cdiv(total_blocks, NUM_CORES)

    kernel = functools.partial(
        _metric_partial_sums_kernel,
        blocks_per_core=blocks_per_core,
        block_rows=block_rows,
        valid_rows=R,
    )

    def in_map(c, b):
        # Clamp so the trailing core never asks for a block past the array;
        # its contribution is zeroed by the in-kernel row mask.
        return (jnp.minimum(c * blocks_per_core + b, total_blocks - 1), 0)

    partials = pl.pallas_call(
        kernel,
        out_shape=jax.ShapeDtypeStruct((NUM_CORES, 1, 1), jnp.float32),
        grid_spec=pltpu.PrefetchScalarGridSpec(
            num_scalar_prefetch=0,
            grid=(NUM_CORES, blocks_per_core),
            in_specs=[pl.BlockSpec((block_rows, LANES), in_map)],
            out_specs=pl.BlockSpec((1, 1, 1), lambda c, b: (c, 0, 0)),
            scratch_shapes=[pltpu.VMEM((SUBLANES, LANES), jnp.float32)],
        ),
        compiler_params=pltpu.CompilerParams(
            # core-split axis is parallel (uses both TCs on v7x); the block
            # axis is the reduction.
            dimension_semantics=("parallel", "arbitrary"),
        ),
    )(x2d)
    return jnp.sum(partials)


def metric_mean(x: jax.Array, *, force_pallas: bool = False,
                small_numel_threshold: int = 1 << 20) -> jax.Array:
    """Pallas equivalent of Metric.update(x); Metric.get() -> scalar mean."""
    numel = x.size
    if numel == 0:
        # Metric.get() with count == 0 is 0/0.
        return jnp.float32(jnp.nan)
    if numel < small_numel_threshold and not force_pallas:
        # Tiny metric tensors: a pallas_call costs more than the fused XLA reduce.
        return jnp.mean(x.astype(jnp.float32))

    flat = x.reshape(-1)                               # free (contiguous)
    n_main = (numel // VREG_ELEMS) * VREG_ELEMS        # vreg-aligned main slab
    if n_main == 0:
        return jnp.sum(flat.astype(jnp.float32)) / jnp.float32(numel)

    # Tail (< 1024 elements) summed with plain jnp — avoids padding/copying the slab.
    if n_main < numel:
        tail_sum = jnp.sum(flat[n_main:].astype(jnp.float32))
        main = flat[:n_main]       # small copy only in the ragged case
    else:
        tail_sum = jnp.float32(0.0)
        main = flat                # common case: zero extra HBM traffic

    x2d = main.reshape(-1, LANES)  # lane-dense [R, 128] slab, original dtype
    total = _pallas_sum_2d(x2d) + tail_sum
    return total / jnp.float32(numel)


class BaseModelJAX:
    """Mirror of BaseModel's structure. forward is abstract; Metric math runs in Pallas."""

    def __init__(self):
        self.loss_fn = None
        self.optimizer = None
        self.metrics_fn = {}
        self.metrics = {}
        self.history = {}
        self.callbacks = []

    def forward(self, X):
        raise AssertionError("forward not defined")  # same as the PyTorch module

    # Metric.update + Metric.get fused: running mean over one logged tensor.
    @staticmethod
    def metric_get(value, **kwargs):
        return metric_mean(value, **kwargs)


if __name__ == "__main__":
    model = BaseModelJAX()

    # 1) Small NCHW batch consistent with the training loop's metric tensors.
    x = jax.random.normal(jax.random.PRNGKey(0), (2, 4, 16, 16), dtype=jnp.float32)
    got = jax.block_until_ready(model.metric_get(x, force_pallas=True))
    want = jnp.mean(x)
    assert jnp.allclose(got, want, rtol=1e-5, atol=1e-6), (got, want)

    # 2) bf16 input, multiple blocks, partial last block, core-split path.
    x2 = jax.random.normal(jax.random.PRNGKey(0), (40, 64, 128), dtype=jnp.bfloat16)
    got2 = jax.block_until_ready(metric_mean(x2, force_pallas=True))
    want2 = jnp.mean(x2.astype(jnp.float32))
    assert jnp.allclose(got2, want2, rtol=1e-4, atol=1e-5), (got2, want2)

    # 3) Ragged size: jnp-side tail + in-kernel row masking.
    x3 = jax.random.normal(jax.random.PRNGKey(0), (7, 3, 50, 11), dtype=jnp.float32)
    got3 = jax.block_until_ready(metric_mean(x3, force_pallas=True))
    want3 = jnp.mean(x3)
    assert jnp.allclose(got3, want3, rtol=1e-5, atol=1e-6), (got3, want3)

    print("KERNEL_OK")
</pallas_src>

<mosaic_0001>
module attributes {stable_mosaic.version = 11 : i64} {
  func.func @_metric_partial_sums_kernel(%arg0: i32, %arg1: i32, %arg2: memref<16x128xf32, #tpu.memory_space<vmem>>, %arg3: memref<1x1x1xf32, #tpu.memory_space<vmem>>, %arg4: memref<8x128xf32, #tpu.memory_space<vmem>>) attributes {dimension_semantics = [#tpu.dimension_semantics<parallel>, #tpu.dimension_semantics<arbitrary>], iteration_bounds = array<i64: 2, 1>, scalar_prefetch = 0 : i64, scratch_operands = 1 : i64, tpu.core_type = #tpu.core_type<tc>, window_params = [{transform_indices = @transform_0, window_bounds = array<i64: 16, 128>}, {transform_indices = @transform_1, window_bounds = array<i64: 1, 1, 1>}]} {
    %c0_i32 = arith.constant 0 : i32
    %0 = arith.cmpi eq, %arg1, %c0_i32 : i32
    %1 = arith.extui %0 : i1 to i32
    %c0_i32_0 = arith.constant 0 : i32
    %2 = arith.cmpi ne, %1, %c0_i32_0 : i32
    scf.if %2 {
      %cst_10 = arith.constant 0.000000e+00 : f32
      %22 = vector.broadcast %cst_10 : f32 to vector<8x128xf32>
      %c0_11 = arith.constant 0 : index
      %c0_12 = arith.constant 0 : index
      %23 = vector.load %arg4[%c0_11, %c0_12] : memref<8x128xf32, #tpu.memory_space<vmem>>, vector<8x128xf32>
      tpu.vector_store %arg4[%c0_11, %c0_12], %22 {strides = array<i32>} : memref<8x128xf32, #tpu.memory_space<vmem>>, vector<8x128xf32>,
    } else {
    }
    %c1_i32 = arith.constant 1 : i32
    %3 = arith.muli %arg0, %c1_i32 : i32
    %4 = arith.addi %3, %arg1 : i32
    %c16_i32 = arith.constant 16 : i32
    %5 = arith.muli %4, %c16_i32 : i32
    %6 = tpu.iota {dimensions = array<i32: 0>} : vector<16x128xi32>
    %7 = vector.broadcast %5 : i32 to vector<16x128xi32>
    %8 = arith.addi %7, %6 : vector<16x128xi32>
    %c0 = arith.constant 0 : index
    %c0_1 = arith.constant 0 : index
    %9 = vector.load %arg2[%c0, %c0_1] : memref<16x128xf32, #tpu.memory_space<vmem>>, vector<16x128xf32>
    %c16_i32_2 = arith.constant 16 : i32
    %10 = vector.broadcast %c16_i32_2 : i32 to vector<16x128xi32>
    %11 = arith.cmpi slt, %8, %10 : vector<16x128xi32>
    %cst = arith.constant 0.000000e+00 : f32
    %12 = vector.broadcast %cst : f32 to vector<16x128xf32>
    %13 = arith.select %11, %9, %12 : vector<16x128xi1>, vector<16x128xf32>
    %c0_3 = arith.constant 0 : index
    %c0_4 = arith.constant 0 : index
    %14 = vector.load %arg4[%c0_3, %c0_4] : memref<8x128xf32, #tpu.memory_space<vmem>>, vector<8x128xf32>
    %15 = vector.shape_cast %13 : vector<16x128xf32> to vector<2x8x128xf32>
    %cst_5 = arith.constant dense<0.000000e+00> : vector<8x128xf32>
    %16 = vector.multi_reduction <add>, %15, %cst_5 [0] : vector<2x8x128xf32> to vector<8x128xf32>
    %17 = arith.addf %14, %16 : vector<8x128xf32>
    %c0_6 = arith.constant 0 : index
    %c0_7 = arith.constant 0 : index
    %18 = vector.load %arg4[%c0_6, %c0_7] : memref<8x128xf32, #tpu.memory_space<vmem>>, vector<8x128xf32>
    tpu.vector_store %arg4[%c0_6, %c0_7], %17 {strides = array<i32>} : memref<8x128xf32, #tpu.memory_space<vmem>>, vector<8x128xf32>,
    %c0_i32_8 = arith.constant 0 : i32
    %19 = arith.cmpi eq, %arg1, %c0_i32_8 : i32
    %20 = arith.extui %19 : i1 to i32
    %c0_i32_9 = arith.constant 0 : i32
    %21 = arith.cmpi ne, %20, %c0_i32_9 : i32
    scf.if %21 {
      %c0_10 = arith.constant 0 : index
      %c0_11 = arith.constant 0 : index
      %22 = vector.load %arg4[%c0_10, %c0_11] : memref<8x128xf32, #tpu.memory_space<vmem>>, vector<8x128xf32>
      %23 = vector.shape_cast %22 : vector<8x128xf32> to vector<1x8x128xf32>
      %cst_12 = arith.constant dense<0.000000e+00> : vector<1xf32>
      %24 = vector.multi_reduction <add>, %23, %cst_12 [1, 2] : vector<1x8x128xf32> to vector<1xf32>
      %25 = vector.shape_cast %24 : vector<1xf32> to vector<1x1x1xf32>
      %26 = vector.extract %25[0, 0, 0] : f32 from vector<1x1x1xf32>
      %27 = vector.broadcast %26 : f32 to vector<1x1x1xf32>
      %c0_13 = arith.constant 0 : index
      %c0_14 = arith.constant 0 : index
      %c0_15 = arith.constant 0 : index
      %28 = vector.load %arg3[%c0_13, %c0_14, %c0_15] : memref<1x1x1xf32, #tpu.memory_space<vmem>>, vector<1x1x1xf32>
      tpu.vector_store %arg3[%c0_13, %c0_14, %c0_15], %27 {strides = array<i32>} : memref<1x1x1xf32, #tpu.memory_space<vmem>>, vector<1x1x1xf32>,
    } else {
    }
    return
  }
  func.func @transform_0(%arg0: i32, %arg1: i32) -> (i32, i32) {
    %c1_i32 = arith.constant 1 : i32
    %0 = arith.muli %arg0, %c1_i32 : i32
    %1 = arith.addi %0, %arg1 : i32
    %c0_i32 = arith.constant 0 : i32
    %2 = arith.minsi %1, %c0_i32 : i32
    %c0_i32_0 = arith.constant 0 : i32
    %c0_i32_1 = arith.constant 0 : i32
    return %2, %c0_i32_0 : i32, i32
  }
  func.func @transform_1(%arg0: i32, %arg1: i32) -> (i32, i32, i32) {
    %c0_i32 = arith.constant 0 : i32
    %c0_i32_0 = arith.constant 0 : i32
    %c0_i32_1 = arith.constant 0 : i32
    return %arg0, %c0_i32, %c0_i32_0 : i32, i32, i32
  }
}

</mosaic_0001>

<llo_original>
// kernel: tpu_custom_call.1
$region0: #{tpu_custom_call.1}
  #allocation0 [shape = 'u32[]', space=smem, size = 0x4, offset = 0x4, fixed_abs, tag = 'smem constant byte address 0x4 - core index']
  #allocation1 [shape = 'u32[144,128]{1,0:T(1,128)}', space=vmem, size = 0x12000, scoped, tag = 'internal scratch']
  #allocation2 [shape = 'f32[8,128]{1,0:T(8,128)}', space=vmem, size = 0x1000, scoped, tag = 'scratch operand']
  %s0 = inlined_call_operand.hbm [shape: f32[16,128], index: 0, kind: input, shape index: {}]
  %s1 = inlined_call_operand.vmem [shape: f32[2,1,1], index: 1, kind: output, shape index: {}]
  %s2 = sld [smem:[#allocation0]]
  $region49: #{tpu_custom_call.1} parent=0
    _
  %s4 = ssub.s32 1, %s2
  %s5 = scalar_select 0, %s4, %s2
  $region1: #{tpu_custom_call.1} parent=0
    #allocation3 [shape = 'u8[16384]{0}', space=vmem, size = 0x4000, scoped, tag = 'input window, operand 0']
    #allocation4 [shape = 's32[2]{0}', space=sflag, size = 0x8, scoped, tag = 'scoped memory for tpu_custom_call.1']
    %6 = vsyncpa [#allocation4], 0
    %s7 = scalar_lea.sflag [#allocation4], 1
    %8 = vsyncpa %s7, 0
    loop: start=0, step=1, limit=4
    $region2: #{tpu_custom_call.1} parent=1 // loop_pre_header
      _
    $region3: #{tpu_custom_call.1} parent=1 // loop_header
      %s10 = sphi 0, %s14
      %p11 = scmp.ge.s32.totalorder %s10, 4
      %s17 = sphi 0, %s29
      %s18 = sphi 0, %s25
      %s19 = sphi 0, %s17
      %s20 = sphi 0, %s18
      %s21 = sphi 0, %s19
      %s22 = sphi 0, %s20
      %s38 = sphi 0, %s40
      %s41 = sphi 0, %s38
      %s42 = sphi 0, %s41
      %s58 = sphi 0, %s42
      %s64 = sphi 0, %s66
      %s67 = sphi 0, %s64
      %s68 = sphi 0, %s67
      %s84 = sphi 0, %s68
    $region4: #{tpu_custom_call.1} parent=1 // loop_header_branch
      %13 = sbr.rel (%p11) target = $region8
    $region5: #{tpu_custom_call.1} parent=1 // loop_body
      %s15 = ssub.s32 %s10, 1
      %s16 = ssub.s32 %s10, 2
      %s23 = sadd.s32 1, %s18
      %p24 = scmp.ge.s32.totalorder %s23, 1
      %s25 = scalar_select %p24, 0, %s23
      %s26 = sadd.s32 1, %s17
      %s27 = scalar_select %p24, %s26, %s17
      %p28 = scmp.ge.s32.totalorder %s27, 2
      %s29 = scalar_select %p28, 0, %s27
      %s30 = sadd.s32 %s17, %s18
      %p31 = scmp.lt.s32.totalorder %s30, 0
      %s32 = scalar_select %p31, %s30, 0
      %s33 = sadd.s32 %s29, %s25
      %p34 = scmp.lt.s32.totalorder %s33, 0
      %s35 = scalar_select %p34, %s33, 0
      %s36 = ssub.s32 %s32, %s35
      %p37 = scmp.eq.s32.totalorder %s36, 0
      %s39 = sadd.s32 %s38, 1
      %s40 = scalar_select %p37, %s38, %s39
      %p43 = pneg %p37
      %p44 = scmp.eq.s32.totalorder %s10, 1
      %p45 = por %p43, %p44
      %p46 = scmp.ne.s32.totalorder %s38, %s41
      %p47 = scmp.eq.s32.totalorder %s10, 0
      %p48 = por %p46, %p47
      %p49 = scmp.ne.s32.totalorder %s38, %s41
      %p50 = scmp.eq.s32.totalorder %s15, 1
      %p51 = por %p49, %p50
      %p52 = scmp.ne.s32.totalorder %s41, %s42
      %p53 = scmp.eq.s32.totalorder %s15, 0
      %p54 = por %p52, %p53
      %p55 = scmp.ne.s32.totalorder %s41, %s42
      %p56 = scmp.eq.s32.totalorder %s16, 1
      %p57 = por %p55, %p56
      %p59 = scmp.ne.s32.totalorder %s42, %s58
      %p60 = scmp.eq.s32.totalorder %s16, 0
      %p61 = por %p59, %p60
      %s62 = ssub.s32 %s17, %s29
      %p63 = scmp.eq.s32.totalorder %s62, 0
      %s65 = sadd.s32 %s64, 1
      %s66 = scalar_select %p63, %s64, %s65
      %p69 = pneg %p63
      %p70 = scmp.eq.s32.totalorder %s10, 1
      %p71 = por %p69, %p70
      %p72 = scmp.ne.s32.totalorder %s64, %s67
      %p73 = scmp.eq.s32.totalorder %s10, 0
      %p74 = por %p72, %p73
      %p75 = scmp.ne.s32.totalorder %s64, %s67
      %p76 = scmp.eq.s32.totalorder %s15, 1
      %p77 = por %p75, %p76
      %p78 = scmp.ne.s32.totalorder %s67, %s68
      %p79 = scmp.eq.s32.totalorder %s15, 0
      %p80 = por %p78, %p79
      %p81 = scmp.ne.s32.totalorder %s67, %s68
      %p82 = scmp.eq.s32.totalorder %s16, 1
      %p83 = por %p81, %p82
      %p85 = scmp.ne.s32.totalorder %s68, %s84
      %p86 = scmp.eq.s32.totalorder %s16, 0
      %p87 = por %p85, %p86
      %p88 = scmp.le.s32.totalorder 1, %s10
      %p89 = scmp.lt.s32.totalorder %s10, 3
      %p90 = pnand %p88, %p89
      %p91 = pneg %p90
      // Predicated region
      $region9: #{tpu_custom_call.1} parent=5 // pred_check
        _
      $region10: #{tpu_custom_call.1} parent=5 // pred_check_branch
        %93 = sbr.rel (%p90) target = $region12
      $region11: #{tpu_custom_call.1} parent=5 // pred_region
        %s94 = ssub.s32 %s10, 1
      $region12: #{tpu_custom_call.1} parent=5 // pred_fallthru
        _
      %p95 = scmp.lt.s32.totalorder %s10, 2
      // Predicated region
      $region13: #{tpu_custom_call.1} parent=5 // pred_check
        %p96 = pneg %p95
      $region14: #{tpu_custom_call.1} parent=5 // pred_check_branch
        %98 = sbr.rel (%p96) target = $region16
      $region15: #{tpu_custom_call.1} parent=5 // pred_region
        // Predicated region
        $region17: #{tpu_custom_call.1} parent=15 // pred_check
          %p99 = pneg %p48
        $region18: #{tpu_custom_call.1} parent=15 // pred_check_branch
          %101 = sbr.rel (%p99) target = $region20
        $region19: #{tpu_custom_call.1} parent=15 // pred_region
          %s102 = sand.u32 %s38, 1
          %s103 = scalar_lea.sflag [#allocation4], %s102
          %s104 = sand.u32 %s38, 1
          %s105 = smul.addr %s104, 16
          %s106 = scalar_lea.vmem [#allocation3], %s105
          %s107 = sadd.s32 %s17, %s18
          %p108 = scmp.lt.s32.totalorder %s107, 0
          %s109 = scalar_select %p108, %s107, 0
          %s110 = smul.u32 2, %s109
          %s112 = ssub.s32 256, 256
          %113 = vsyncadd %s103, %s112
          %s114 = smul.addr %s110, 128
          %s115 = scalar_lea.hbm %s0, %s114
          %s116 = sshll.u32 %s106, 4
          %s117 = int_to_ptr.vmem [resolvable:$true] %s116
          %122 = dma.hbm_to_vmem [thread:$0]  %s115, 256, %s117, %s103, 128, 128, 8
        $region20: #{tpu_custom_call.1} parent=15 // pred_fallthru
          _
      $region16: #{tpu_custom_call.1} parent=5 // pred_fallthru
        _
      %p123 = scmp.le.s32.totalorder 1, %s10
      %p124 = scmp.lt.s32.totalorder %s10, 3
      %p125 = pnand %p123, %p124
      %p126 = pneg %p125
      // Predicated region
      $region21: #{tpu_custom_call.1} parent=5 // pred_check
        _
      $region22: #{tpu_custom_call.1} parent=5 // pred_check_branch
        %128 = sbr.rel (%p125) target = $region24
      $region23: #{tpu_custom_call.1} parent=5 // pred_region
        %s129 = ssub.s32 %s10, 1
        %s130 = sand.u32 %s41, 1
        %s131 = scalar_lea.sflag [#allocation4], %s130
        %s132 = sand.u32 %s41, 1
        %s133 = smul.addr %s132, 16
        %s134 = scalar_lea.vmem [#allocation3], %s133
        // Predicated region
        $region25: #{tpu_custom_call.1} parent=23 // pred_check
          %p135 = pneg %p54
        $region26: #{tpu_custom_call.1} parent=23 // pred_check_branch
          %137 = sbr.rel (%p135) target = $region28
        $region27: #{tpu_custom_call.1} parent=23 // pred_region
          %138 = dma.done %s131, 256
        $region28: #{tpu_custom_call.1} parent=23 // pred_fallthru
          _
        %s139 = sand.u32 %s41, 1
        %s140 = scalar_lea.sflag [#allocation4], %s139
        %s141 = sand.u32 %s41, 1
        %s142 = smul.addr %s141, 16
        %s143 = scalar_lea.vmem [#allocation3], %s142
        %p144 = pneg %p54
        %p145 = pneg %p51
        %p146 = pneg %p80
        %p147 = pneg %p77
        %p148 = scmp.lt.s32.totalorder %s19, 1
        %s149 = scalar_select %p148, %s19, 1
        %s150 = scalar_lea.vmem %s1, %s149
        %s151 = sadd.s32 %s19, %s20
        %p152 = scmp.lt.s32.totalorder %s151, 0
        %s153 = scalar_select %p152, %s151, 0
        %s154 = smul.u32 2, %s153
        %p155 = scmp.lt.s32.totalorder %s19, 1
        %s156 = scalar_select %p155, %s19, 1
        %s157 = scalar_lea.vmem %s1, %s156
        %p158 = scmp.eq.s32.totalorder %s20, 0
        // Predicated region
        $region29: #{tpu_custom_call.1} parent=23 // pred_check
          %p159 = pneg %p158
        $region30: #{tpu_custom_call.1} parent=23 // pred_check_branch
          %161 = sbr.rel (%p159) target = $region32
        $region31: #{tpu_custom_call.1} parent=23 // pred_region
          %162 = vst [vmem:[#allocation2] sm:$0xff] 0.0
        $region32: #{tpu_custom_call.1} parent=23 // pred_fallthru
          _
        %s163 = sadd.s32 %s19, %s20
        %s164 = smul.u32 %s163, 16
        %v165 = vlaneseq
        %v166 = vshrl.u32 %v165, 7
        %v167 = vadd.s32 %v166, 8
        %v168 = vstv %s164
        %v169 = vadd.s32 %v168, %v166
        %v170 = vadd.s32 %v168, %v167
        %v171 = vld [vmem:[%s134] sm:$0xff]
        %v172 = vld [vmem:[%s134 + $0x8] sm:$0xff]
        %vm173 = vcmp.lt.s32.totalorder %v169, 16
        %vm174 = vcmp.lt.s32.totalorder %v170, 16
        %v175 = vsel %vm173, %v171, 0.0
        %v176 = vsel %vm174, %v172, 0.0
        %v177 = vld [vmem:[#allocation2] sm:$0xff]
        %v178 = vadd.f32 %v175, %v176
        %v179 = vadd.f32 %v177, %v178
        %180 = vst [vmem:[#allocation2] sm:$0xff] %v179
        // Predicated region
        $region33: #{tpu_custom_call.1} parent=23 // pred_check
          %p181 = pneg %p158
        $region34: #{tpu_custom_call.1} parent=23 // pred_check_branch
          %183 = sbr.rel (%p181) target = $region36
        $region35: #{tpu_custom_call.1} parent=23 // pred_region
          %v184 = vld [vmem:[#allocation2] sm:$0xff]
          %185 = vadd.xlane.f32.xlu0 %v184
          %v186 = vpop.xlane.xlu0 %185
          %v187 = vrot.slane %v186, 4
          %v188 = vadd.f32 %v186, %v187
          %v189 = vrot.slane %v188, 2
          %v190 = vadd.f32 %v188, %v189
          %v191 = vrot.slane %v190, 1
          %v192 = vadd.f32 %v190, %v191
          %s193 = vtos %v192
          %v194 = vstv %s193
          %vm195 = vcmask 0
          %196 = vst.msk [vmem:[%s157] sm:$0x1] %vm195, %v194
        $region36: #{tpu_custom_call.1} parent=23 // pred_fallthru
          _
        %p197 = scmp.lt.s32.totalorder %s19, 1
        %s198 = scalar_select %p197, %s19, 1
        %s199 = scalar_lea.vmem %s1, %s198
        // Predicated region
        $region37: #{tpu_custom_call.1} parent=23 // pred_check
          %p200 = pneg %p77
        $region38: #{tpu_custom_call.1} parent=23 // pred_check_branch
          %202 = sbr.rel (%p200) target = $region40
        $region39: #{tpu_custom_call.1} parent=23 // pred_region
          _
        $region40: #{tpu_custom_call.1} parent=23 // pred_fallthru
          _
      $region24: #{tpu_custom_call.1} parent=5 // pred_fallthru
        _
      %p203 = scmp.le.s32.totalorder 2, %s10
      // Predicated region
      $region41: #{tpu_custom_call.1} parent=5 // pred_check
        %p204 = pneg %p203
      $region42: #{tpu_custom_call.1} parent=5 // pred_check_branch
        %206 = sbr.rel (%p204) target = $region44
      $region43: #{tpu_custom_call.1} parent=5 // pred_region
        %s207 = ssub.s32 %s10, 2
        // Predicated region
        $region45: #{tpu_custom_call.1} parent=43 // pred_check
          %p208 = pneg %p83
        $region46: #{tpu_custom_call.1} parent=43 // pred_check_branch
          %210 = sbr.rel (%p208) target = $region48
        $region47: #{tpu_custom_call.1} parent=43 // pred_region
          %p211 = scmp.lt.s32.totalorder %s21, 1
          %s212 = scalar_select %p211, %s21, 1
          %s213 = scalar_lea.vmem %s1, %s212
        $region48: #{tpu_custom_call.1} parent=43 // pred_fallthru
          _
      $region44: #{tpu_custom_call.1} parent=5 // pred_fallthru
        _
    $region6: #{tpu_custom_call.1} parent=1 // loop_footer
      %s14 = sadd.s32 1, %s10
    $region7: #{tpu_custom_call.1} parent=1 // loop_footer_branch
      %9 = sbr.rel target = $region3
    $region8: #{tpu_custom_call.1} parent=1 // loop_exit
      _
    %214 = vsyncpa [#allocation4], 1
    %s215 = scalar_lea.sflag [#allocation4], 1
    %216 = vsyncpa %s215, 1

</llo_original>
